<compile_context>
chip_gen: v7x
topology: tpu7x:2x2x1
jax: 0.10.0
libtpu: 0.0.40
codegen_flags: <defaults>
</compile_context>

<pallas_src>
import functools
import math

import jax
import jax.numpy as jnp
from jax.experimental import pallas as pl
from jax.experimental.pallas import tpu as pltpu

_LANE = 128           # lane width: last block dim is always 128 (lane-dense stores)
_MAX_ROW_TILE = 512   # sublane tile; 512x128 f32 x (3 in + 1 out) x 2 bufs = 2 MiB VMEM


# ---------------------------------------------------------------------------
# Fused elementwise kernel: sigma -> gaussian prob -> sigma_ycap -> entropy
# ---------------------------------------------------------------------------
def _confidence_kernel(y_ref, yc_ref, c_ref, o_ref, *, beta, eps):
    two_pi = 2.0 * math.pi

    y = y_ref[...]
    y_cap = yc_ref[...]
    c = c_ref[...]

    # get_sigma(confidence): clamp below by eps, then 1 / (2*pi*c)
    c = jnp.where(c < eps, eps, c)
    sigma = 1.0 / (two_pi * c)

    # p_ycap_y(y, y_cap, sigma)
    diff = -((y - y_cap) ** 2)
    diff_normalized = diff / (2.0 * sigma * sigma)
    prob = jnp.exp(diff_normalized)                 # EUP
    prob_normalized = prob * (1.0 / (two_pi * sigma))

    # get_sigma(P_YCAP_Y)
    p = jnp.where(prob_normalized < eps, eps, prob_normalized)
    sigma_ycap = 1.0 / (two_pi * p)

    # get_entropy(sigma_ycap)
    o_ref[...] = 0.5 * jnp.log(two_pi * math.e * sigma_ycap * sigma_ycap) * beta


# ---------------------------------------------------------------------------
# Wrapper: flatten to a lane-dense (rows, 128) slab, pad, tile rows, un-pad.
# ---------------------------------------------------------------------------
def confidence_entropy(y, y_cap, confidence, *, beta=0.1, epsilon=1e-8):
    if isinstance(confidence, int):
        # torch: `if isinstance(confidence, int): confidence = torch.ones_like(y)`
        confidence = jnp.ones_like(y)

    orig_shape = y.shape
    total = y.size

    rows = pl.cdiv(total, _LANE)
    rows8 = pl.cdiv(rows, 8) * 8                      # respect (8,128) tiling
    row_tile = min(_MAX_ROW_TILE, rows8)              # big tiles; multiple steps when large
    rows_padded = pl.cdiv(rows8, row_tile) * row_tile
    padded_total = rows_padded * _LANE

    def prep(a, fill):
        flat = jnp.ravel(a).astype(jnp.float32)
        flat = jnp.pad(flat, (0, padded_total - total), constant_values=fill)
        return flat.reshape(rows_padded, _LANE)

    y2 = prep(y, 0.0)
    yc2 = prep(y_cap, 0.0)
    c2 = prep(confidence, 1.0)                        # safe fill; padded rows are discarded

    out = pl.pallas_call(
        functools.partial(_confidence_kernel, beta=beta, eps=epsilon),
        out_shape=jax.ShapeDtypeStruct((rows_padded, _LANE), jnp.float32),
        grid=(rows_padded // row_tile,),
        in_specs=[
            pl.BlockSpec((row_tile, _LANE), lambda i: (i, 0)),
            pl.BlockSpec((row_tile, _LANE), lambda i: (i, 0)),
            pl.BlockSpec((row_tile, _LANE), lambda i: (i, 0)),
        ],
        out_specs=pl.BlockSpec((row_tile, _LANE), lambda i: (i, 0)),
        compiler_params=pltpu.CompilerParams(dimension_semantics=("parallel",)),
    )(y2, yc2, c2)

    return out.reshape(-1)[:total].reshape(orig_shape)


# ---------------------------------------------------------------------------
# Pure-JAX reference (literal transcription of the torch math, for checking)
# ---------------------------------------------------------------------------
def _ref_confidence(y, y_cap, confidence, beta=0.1, eps=1e-8):
    if isinstance(confidence, int):
        confidence = jnp.ones_like(y)

    def get_sigma(c):
        mask = (c < eps).astype(c.dtype)
        c = (1.0 - mask) * c + jnp.ones_like(c) * eps * mask
        return 1.0 / (2.0 * math.pi * c)

    sigma = get_sigma(confidence)
    diff = -((y - y_cap) ** 2)
    diff_normalized = diff / (2.0 * sigma ** 2)
    prob = jnp.exp(diff_normalized)
    prob_normalized = prob * (1.0 / (2.0 * math.pi * sigma))
    sigma_ycap = get_sigma(prob_normalized)
    return 0.5 * jnp.log(2.0 * math.pi * math.e * sigma_ycap ** 2) * beta


# ---------------------------------------------------------------------------
if __name__ == "__main__":
    B, C, H, W = 2, 4, 16, 16
    key = jax.random.PRNGKey(0)
    k_y, k_yc, k_c = jax.random.split(key, 3)

    y = jax.random.normal(k_y, (B, C, H, W), jnp.float32)
    y_cap = jax.random.normal(k_yc, (B, C, H, W), jnp.float32)
    confidence = jax.random.uniform(k_c, (B, C, H, W), jnp.float32,
                                    minval=0.0, maxval=1.0)

    # tensor-confidence path
    out = jax.block_until_ready(confidence_entropy(y, y_cap, confidence))
    assert out.shape == (B, C, H, W), out.shape
    assert bool(jnp.all(jnp.isfinite(out)))
    ref = _ref_confidence(y, y_cap, confidence)
    err = float(jnp.max(jnp.abs(out - ref)))
    assert jnp.allclose(out, ref, atol=1e-5, rtol=1e-5), err

    # int-confidence path (torch replaces it with ones_like(y))
    out_i = jax.block_until_ready(confidence_entropy(y, y_cap, 1))
    ref_i = _ref_confidence(y, y_cap, 1)
    err_i = float(jnp.max(jnp.abs(out_i - ref_i)))
    assert jnp.allclose(out_i, ref_i, atol=1e-5, rtol=1e-5), err_i

    print("KERNEL_OK")
</pallas_src>

<mosaic_0001>
module attributes {stable_mosaic.version = 11 : i64} {
  func.func @_confidence_kernel(%arg0: i32, %arg1: memref<16x128xf32, #tpu.memory_space<vmem>>, %arg2: memref<16x128xf32, #tpu.memory_space<vmem>>, %arg3: memref<16x128xf32, #tpu.memory_space<vmem>>, %arg4: memref<16x128xf32, #tpu.memory_space<vmem>>) attributes {dimension_semantics = [#tpu.dimension_semantics<parallel>], iteration_bounds = array<i64: 1>, scalar_prefetch = 0 : i64, scratch_operands = 0 : i64, tpu.core_type = #tpu.core_type<tc>, window_params = [{transform_indices = @transform_0, window_bounds = array<i64: 16, 128>}, {transform_indices = @transform_1, window_bounds = array<i64: 16, 128>}, {transform_indices = @transform_2, window_bounds = array<i64: 16, 128>}, {transform_indices = @transform_3, window_bounds = array<i64: 16, 128>}]} {
    %c0 = arith.constant 0 : index
    %c0_0 = arith.constant 0 : index
    %0 = vector.load %arg1[%c0, %c0_0] : memref<16x128xf32, #tpu.memory_space<vmem>>, vector<16x128xf32>
    %c0_1 = arith.constant 0 : index
    %c0_2 = arith.constant 0 : index
    %1 = vector.load %arg2[%c0_1, %c0_2] : memref<16x128xf32, #tpu.memory_space<vmem>>, vector<16x128xf32>
    %c0_3 = arith.constant 0 : index
    %c0_4 = arith.constant 0 : index
    %2 = vector.load %arg3[%c0_3, %c0_4] : memref<16x128xf32, #tpu.memory_space<vmem>>, vector<16x128xf32>
    %cst = arith.constant 9.99999993E-9 : f32
    %3 = vector.broadcast %cst : f32 to vector<16x128xf32>
    %4 = arith.cmpf olt, %2, %3 : vector<16x128xf32>
    %cst_5 = arith.constant 9.99999993E-9 : f32
    %5 = vector.broadcast %cst_5 : f32 to vector<16x128xf32>
    %6 = arith.select %4, %5, %2 : vector<16x128xi1>, vector<16x128xf32>
    %cst_6 = arith.constant 6.28318548 : f32
    %7 = vector.broadcast %cst_6 : f32 to vector<16x128xf32>
    %8 = arith.mulf %7, %6 : vector<16x128xf32>
    %cst_7 = arith.constant 1.000000e+00 : f32
    %9 = vector.broadcast %cst_7 : f32 to vector<16x128xf32>
    %10 = arith.divf %9, %8 : vector<16x128xf32>
    %11 = arith.subf %0, %1 : vector<16x128xf32>
    %12 = arith.mulf %11, %11 : vector<16x128xf32>
    %cst_8 = arith.constant 0.000000e+00 : f32
    %13 = vector.broadcast %cst_8 : f32 to vector<16x128xf32>
    %14 = arith.subf %13, %12 : vector<16x128xf32>
    %cst_9 = arith.constant 2.000000e+00 : f32
    %15 = vector.broadcast %cst_9 : f32 to vector<16x128xf32>
    %16 = arith.mulf %15, %10 : vector<16x128xf32>
    %17 = arith.mulf %16, %10 : vector<16x128xf32>
    %18 = arith.divf %14, %17 : vector<16x128xf32>
    %19 = math.exp %18 : vector<16x128xf32>
    %cst_10 = arith.constant 6.28318548 : f32
    %20 = vector.broadcast %cst_10 : f32 to vector<16x128xf32>
    %21 = arith.mulf %20, %10 : vector<16x128xf32>
    %cst_11 = arith.constant 1.000000e+00 : f32
    %22 = vector.broadcast %cst_11 : f32 to vector<16x128xf32>
    %23 = arith.divf %22, %21 : vector<16x128xf32>
    %24 = arith.mulf %19, %23 : vector<16x128xf32>
    %cst_12 = arith.constant 9.99999993E-9 : f32
    %25 = vector.broadcast %cst_12 : f32 to vector<16x128xf32>
    %26 = arith.cmpf olt, %24, %25 : vector<16x128xf32>
    %cst_13 = arith.constant 9.99999993E-9 : f32
    %27 = vector.broadcast %cst_13 : f32 to vector<16x128xf32>
    %28 = arith.select %26, %27, %24 : vector<16x128xi1>, vector<16x128xf32>
    %cst_14 = arith.constant 6.28318548 : f32
    %29 = vector.broadcast %cst_14 : f32 to vector<16x128xf32>
    %30 = arith.mulf %29, %28 : vector<16x128xf32>
    %cst_15 = arith.constant 1.000000e+00 : f32
    %31 = vector.broadcast %cst_15 : f32 to vector<16x128xf32>
    %32 = arith.divf %31, %30 : vector<16x128xf32>
    %cst_16 = arith.constant 17.0794678 : f32
    %33 = vector.broadcast %cst_16 : f32 to vector<16x128xf32>
    %34 = arith.mulf %33, %32 : vector<16x128xf32>
    %35 = arith.mulf %34, %32 : vector<16x128xf32>
    %36 = math.log %35 : vector<16x128xf32>
    %cst_17 = arith.constant 5.000000e-01 : f32
    %37 = vector.broadcast %cst_17 : f32 to vector<16x128xf32>
    %38 = arith.mulf %37, %36 : vector<16x128xf32>
    %cst_18 = arith.constant 1.000000e-01 : f32
    %39 = vector.broadcast %cst_18 : f32 to vector<16x128xf32>
    %40 = arith.mulf %38, %39 : vector<16x128xf32>
    %c0_19 = arith.constant 0 : index
    %c0_20 = arith.constant 0 : index
    %41 = vector.load %arg4[%c0_19, %c0_20] : memref<16x128xf32, #tpu.memory_space<vmem>>, vector<16x128xf32>
    tpu.vector_store %arg4[%c0_19, %c0_20], %40 {strides = array<i32>} : memref<16x128xf32, #tpu.memory_space<vmem>>, vector<16x128xf32>,
    return
  }
  func.func @transform_0(%arg0: i32) -> (i32, i32) {
    %c0_i32 = arith.constant 0 : i32
    %c0_i32_0 = arith.constant 0 : i32
    return %arg0, %c0_i32 : i32, i32
  }
  func.func @transform_1(%arg0: i32) -> (i32, i32) {
    %c0_i32 = arith.constant 0 : i32
    %c0_i32_0 = arith.constant 0 : i32
    return %arg0, %c0_i32 : i32, i32
  }
  func.func @transform_2(%arg0: i32) -> (i32, i32) {
    %c0_i32 = arith.constant 0 : i32
    %c0_i32_0 = arith.constant 0 : i32
    return %arg0, %c0_i32 : i32, i32
  }
  func.func @transform_3(%arg0: i32) -> (i32, i32) {
    %c0_i32 = arith.constant 0 : i32
    %c0_i32_0 = arith.constant 0 : i32
    return %arg0, %c0_i32 : i32, i32
  }
}

</mosaic_0001>

<llo_original>
// kernel: tpu_custom_call.1
$region0: #{tpu_custom_call.1}
  #allocation0 [shape = 'u32[]', space=smem, size = 0x4, offset = 0x4, fixed_abs, tag = 'smem constant byte address 0x4 - core index']
  #allocation1 [shape = 'u32[144,128]{1,0:T(1,128)}', space=vmem, size = 0x12000, scoped, tag = 'internal scratch']
  %s0 = inlined_call_operand.hbm [shape: f32[16,128], index: 0, kind: input, shape index: {}]
  %s1 = inlined_call_operand.hbm [shape: f32[16,128], index: 1, kind: input, shape index: {}]
  %s2 = inlined_call_operand.hbm [shape: f32[16,128], index: 2, kind: input, shape index: {}]
  %s3 = inlined_call_operand.hbm [shape: f32[16,128], index: 3, kind: output, shape index: {}]
  %s4 = sld [smem:[#allocation0]]
  $region34: #{tpu_custom_call.1} parent=0
    _
  %s6 = ssub.s32 1, %s4
  %s7 = scalar_select 0, %s6, %s4
  $region1: #{tpu_custom_call.1} parent=0
    #allocation2 [shape = 'u8[8192]{0}', space=vmem, size = 0x2000, scoped, tag = 'input window, operand 0, single buffered']
    #allocation3 [shape = 's32[1]{0}', space=sflag, size = 0x4, scoped, tag = 'scoped memory for tpu_custom_call.1']
    #allocation4 [shape = 's32[1]{0}', space=sflag, size = 0x4, scoped, tag = 'scoped memory for tpu_custom_call.1']
    #allocation5 [shape = 'u8[8192]{0}', space=vmem, size = 0x2000, scoped, tag = 'input window, operand 1, single buffered']
    #allocation6 [shape = 's32[1]{0}', space=sflag, size = 0x4, scoped, tag = 'scoped memory for tpu_custom_call.1']
    #allocation7 [shape = 'u8[8192]{0}', space=vmem, size = 0x2000, scoped, tag = 'input window, operand 2, single buffered']
    #allocation8 [shape = 'u8[8192]{0}', space=vmem, size = 0x2000, scoped, tag = 'output window, operand 0, single buffered']
    %8 = vsyncpa [#allocation3], 0
    %9 = vsyncpa [#allocation6], 0
    %10 = vsyncpa [#allocation4], 0
    // Predicated region
    $region2: #{tpu_custom_call.1} parent=1 // pred_check
      _
    $region3: #{tpu_custom_call.1} parent=1 // pred_check_branch
      %12 = sbr.rel (0) target = $region5
    $region4: #{tpu_custom_call.1} parent=1 // pred_region
      %s14 = ssub.s32 256, 256
      %15 = vsyncadd [#allocation3], %s14
      %s16 = sshll.u32 [#allocation2], 4
      %s17 = int_to_ptr.vmem [resolvable:$true] %s16
      %22 = dma.hbm_to_vmem [thread:$0]  %s0, 256, %s17, [#allocation3], 128, 128, 8
    $region5: #{tpu_custom_call.1} parent=1 // pred_fallthru
      _
    // Predicated region
    $region6: #{tpu_custom_call.1} parent=1 // pred_check
      _
    $region7: #{tpu_custom_call.1} parent=1 // pred_check_branch
      %24 = sbr.rel (0) target = $region9
    $region8: #{tpu_custom_call.1} parent=1 // pred_region
      %s26 = ssub.s32 256, 256
      %27 = vsyncadd [#allocation6], %s26
      %s28 = sshll.u32 [#allocation5], 4
      %s29 = int_to_ptr.vmem [resolvable:$true] %s28
      %34 = dma.hbm_to_vmem [thread:$0]  %s1, 256, %s29, [#allocation6], 128, 128, 8
    $region9: #{tpu_custom_call.1} parent=1 // pred_fallthru
      _
    // Predicated region
    $region10: #{tpu_custom_call.1} parent=1 // pred_check
      _
    $region11: #{tpu_custom_call.1} parent=1 // pred_check_branch
      %36 = sbr.rel (0) target = $region13
    $region12: #{tpu_custom_call.1} parent=1 // pred_region
      %s38 = ssub.s32 256, 256
      %39 = vsyncadd [#allocation6], %s38
      %s40 = sshll.u32 [#allocation7], 4
      %s41 = int_to_ptr.vmem [resolvable:$true] %s40
      %46 = dma.hbm_to_vmem [thread:$0]  %s2, 256, %s41, [#allocation6], 128, 128, 8
    $region13: #{tpu_custom_call.1} parent=1 // pred_fallthru
      _
    // Predicated region
    $region14: #{tpu_custom_call.1} parent=1 // pred_check
      _
    $region15: #{tpu_custom_call.1} parent=1 // pred_check_branch
      %48 = sbr.rel (0) target = $region17
    $region16: #{tpu_custom_call.1} parent=1 // pred_region
      %49 = dma.done [#allocation3], 256
    $region17: #{tpu_custom_call.1} parent=1 // pred_fallthru
      _
    // Predicated region
    $region18: #{tpu_custom_call.1} parent=1 // pred_check
      _
    $region19: #{tpu_custom_call.1} parent=1 // pred_check_branch
      %51 = sbr.rel (0) target = $region21
    $region20: #{tpu_custom_call.1} parent=1 // pred_region
      %52 = dma.done [#allocation6], 256
    $region21: #{tpu_custom_call.1} parent=1 // pred_fallthru
      _
    // Predicated region
    $region22: #{tpu_custom_call.1} parent=1 // pred_check
      _
    $region23: #{tpu_custom_call.1} parent=1 // pred_check_branch
      %54 = sbr.rel (0) target = $region25
    $region24: #{tpu_custom_call.1} parent=1 // pred_region
      %55 = dma.done [#allocation6], 256
    $region25: #{tpu_custom_call.1} parent=1 // pred_fallthru
      _
    %v56 = vld [vmem:[#allocation2] sm:$0xff]
    %v57 = vld [vmem:[#allocation2 + $0x8] sm:$0xff]
    %v58 = vld [vmem:[#allocation5] sm:$0xff]
    %v59 = vld [vmem:[#allocation5 + $0x8] sm:$0xff]
    %v60 = vld [vmem:[#allocation7] sm:$0xff]
    %v61 = vld [vmem:[#allocation7 + $0x8] sm:$0xff]
    %vm62 = vcmp.lt.f32.partialorder %v60, 1e-08
    %vm63 = vcmp.lt.f32.partialorder %v61, 1e-08
    %v64 = vsel %vm62, 1e-08, %v60
    %v65 = vsel %vm63, 1e-08, %v61
    %v66 = vmul.f32 %v64, 6.2831855
    %v67 = vmul.f32 %v65, 6.2831855
    %v68 = vrcp.pop %v66
    %v69 = vmul.f32 1.0, %v68
    %v70 = vrcp.pop %v67
    %v71 = vmul.f32 1.0, %v70
    %v72 = vsub.f32 %v56, %v58
    %v73 = vsub.f32 %v57, %v59
    %v74 = vmul.f32 %v72, %v72
    %v75 = vmul.f32 %v73, %v73
    %v76 = vsub.f32 0.0, %v74
    %v77 = vsub.f32 0.0, %v75
    %v78 = vmul.f32 %v69, 2.0
    %v79 = vmul.f32 %v71, 2.0
    %v80 = vmul.f32 %v78, %v69
    %v81 = vmul.f32 %v79, %v71
    %v82 = vrcp.pop %v80
    %v83 = vmul.f32 %v76, %v82
    %v84 = vrcp.pop %v81
    %v85 = vmul.f32 %v77, %v84
    %v86 = vmul.f32 %v83, 1.442695
    %v87 = vpow.pop %v86
    %v88 = vmul.f32 %v85, 1.442695
    %v89 = vpow.pop %v88
    %v90 = vmul.f32 %v69, 6.2831855
    %v91 = vmul.f32 %v71, 6.2831855
    %v92 = vrcp.pop %v90
    %v93 = vmul.f32 1.0, %v92
    %v94 = vrcp.pop %v91
    %v95 = vmul.f32 1.0, %v94
    %v96 = vmul.f32 %v87, %v93
    %v97 = vmul.f32 %v89, %v95
    %vm98 = vcmp.lt.f32.partialorder %v96, 1e-08
    %vm99 = vcmp.lt.f32.partialorder %v97, 1e-08
    %v100 = vsel %vm98, 1e-08, %v96
    %v101 = vsel %vm99, 1e-08, %v97
    %v102 = vmul.f32 %v100, 6.2831855
    %v103 = vmul.f32 %v101, 6.2831855
    %v104 = vrcp.pop %v102
    %v105 = vmul.f32 1.0, %v104
    %v106 = vrcp.pop %v103
    %v107 = vmul.f32 1.0, %v106
    %v108 = vmul.f32 %v105, 17.079468
    %v109 = vmul.f32 %v107, 17.079468
    %v110 = vmul.f32 %v108, %v105
    %v111 = vmul.f32 %v109, %v107
    %v112 = vlog2.pop %v110
    %v113 = vmul.f32 %v112, 0.6931472
    %v114 = vlog2.pop %v111
    %v115 = vmul.f32 %v114, 0.6931472
    %v116 = vmul.f32 %v113, 0.5
    %v117 = vmul.f32 %v115, 0.5
    %v118 = vmul.f32 %v116, 0.1
    %v119 = vmul.f32 %v117, 0.1
    %120 = vst [vmem:[#allocation8] sm:$0xff] %v118
    %121 = vst [vmem:[#allocation8 + $0x8] sm:$0xff] %v119
    // Predicated region
    $region26: #{tpu_custom_call.1} parent=1 // pred_check
      _
    $region27: #{tpu_custom_call.1} parent=1 // pred_check_branch
      %123 = sbr.rel (0) target = $region29
    $region28: #{tpu_custom_call.1} parent=1 // pred_region
      %s125 = ssub.s32 256, 256
      %126 = vsyncadd [#allocation4], %s125
      %s127 = sshll.u32 [#allocation8], 4
      %s128 = int_to_ptr.vmem [resolvable:$true] %s127
      %133 = dma.vmem_to_hbm [thread:$0]  %s128, 256, %s3, [#allocation4], 128, 128, 8
    $region29: #{tpu_custom_call.1} parent=1 // pred_fallthru
      _
    // Predicated region
    $region30: #{tpu_custom_call.1} parent=1 // pred_check
      _
    $region31: #{tpu_custom_call.1} parent=1 // pred_check_branch
      %135 = sbr.rel (0) target = $region33
    $region32: #{tpu_custom_call.1} parent=1 // pred_region
      %136 = dma.done [#allocation4], 256
    $region33: #{tpu_custom_call.1} parent=1 // pred_fallthru
      _
    %137 = vsyncpa [#allocation3], 1
    %138 = vsyncpa [#allocation6], 1
    %139 = vsyncpa [#allocation4], 1

</llo_original>
